<compile_context>
chip_gen: v5e
topology: v5e:2x2
jax: 0.10.0
libtpu: 0.0.40
codegen_flags: <defaults>
</compile_context>

<pallas_src>
import jax
import jax.numpy as jnp
from jax.experimental import pallas as pl
from jax.experimental.pallas import tpu as pltpu


def fc_block_kernel(x_ref, w_t_ref, hidden_w_ref, head_w_ref, vecs_ref, out_ref):
    x = x_ref[...]                          # [TB, C] f32
    C = x.shape[1]
    H = C // 2

    # Packed bias/scale rows: [5, C] (f32)
    #   row 0: Lin_bidirectional bias (C)
    #   row 1: [lina_b | linb_b]
    #   row 2: [linc_b | lind_b]
    #   row 3: [mults_b | adds_b]    (fused head bias)
    #   row 4: [m_scale | add_scale] (fused head scale)
    vecs = vecs_ref[...]
    lin_b = vecs[0:1, :]                    # [1, C]
    lina_b = vecs[1:2, :H]
    linb_b = vecs[1:2, H:]
    linc_b = vecs[2:3, :H]
    lind_b = vecs[2:3, H:]
    head_b = vecs[3:4, :]                   # [1, 2H]
    head_scale = vecs[4:5, :]               # [1, 2H]

    relu = lambda t: jnp.maximum(t, 0.0)
    bf16 = jnp.bfloat16

    # ---- Lin_bidirectional: data = x @ W.T + b ----
    # bf16 x bf16 MXU matmul, f32 accumulation; W.T pre-computed / pre-cast on host.
    data = jnp.dot(x.astype(bf16), w_t_ref[...],
                   preferred_element_type=jnp.float32) + lin_b      # [TB, C] f32

    xa = data[:, :H]
    y = data[:, H:]

    def lin(t, idx, b):
        # hidden_w_ref[idx] is the pre-transposed bf16 [H, H] weight -> t @ W.T + b
        return jnp.dot(t.astype(bf16), hidden_w_ref[idx],
                       preferred_element_type=jnp.float32) + b

    # ---- Affine.compute_nets (residual adds / biases in f32) ----
    t = lin(relu(xa), 0, lina_b)
    t = lin(relu(t), 1, linb_b) + xa
    prex = t
    t = lin(relu(t), 2, linc_b)
    t = lin(relu(t), 3, lind_b) + prex
    t = relu(t)

    # Fused mults/adds head: one [TB,H] x [H,2H] bf16 matmul, then split.
    ma = (jnp.dot(t.astype(bf16), head_w_ref[...],
                  preferred_element_type=jnp.float32) + head_b) * head_scale
    m = ma[:, :H]
    a = ma[:, H:]

    # ---- Affine.forward: out = [xa | y * exp(m) + a] ----
    # Direct half-writes (no concat): C=32 < 128 lanes -> stores are masked
    # either way, and this avoids the extra lane-shift/select of the concat.
    out_ref[:, :H] = xa
    out_ref[:, H:] = y * jnp.exp(m) + a


def _num_tensorcores():
    # v7x has 2 TensorCores per chip; v5e/v6e have 1. Best-effort detection.
    try:
        kind = jax.devices()[0].device_kind.lower()
        return 2 if ("v7" in kind or "7x" in kind) else 1
    except Exception:
        return 1


def _pick_block_batch(batch, n_tc):
    """Largest row tile <= 256 that divides `batch` and leaves >= n_tc grid steps."""
    if batch <= 0:
        return 1
    target = min(256, max(1, batch // max(1, n_tc)))
    for tb in range(min(target, batch), 0, -1):
        if batch % tb == 0:
            return tb
    return batch


def fc_block_forward(x, params, *, block_batch=None):
    B, C = x.shape
    H = C // 2

    if block_batch is None:
        block_batch = _pick_block_batch(B, _num_tensorcores())
    assert B % block_batch == 0, "batch must be a multiple of block_batch"

    bf16 = jnp.bfloat16

    # Host-side packing / pre-transposition / bf16 cast (one-time XLA ops).
    w_t = params["w"].T.astype(bf16)                                       # [C, C]
    hidden_w_t = jnp.stack([params["lina_w"].T, params["linb_w"].T,
                            params["linc_w"].T, params["lind_w"].T]
                           ).astype(bf16)                                  # [4, H, H]
    head_w_t = jnp.concatenate([params["mults_w"].T, params["adds_w"].T],
                               axis=1).astype(bf16)                        # [H, 2H]
    vecs = jnp.stack([
        params["b"],
        jnp.concatenate([params["lina_b"], params["linb_b"]]),
        jnp.concatenate([params["linc_b"], params["lind_b"]]),
        jnp.concatenate([params["mults_b"], params["adds_b"]]),
        jnp.concatenate([params["m_scale"], params["add_scale"]]),
    ]).astype(jnp.float32)                                                 # [5, C]

    grid = (B // block_batch,)

    return pl.pallas_call(
        fc_block_kernel,
        out_shape=jax.ShapeDtypeStruct((B, C), jnp.float32),
        grid_spec=pl.GridSpec(
            grid=grid,
            in_specs=[
                # x: tiled over the batch axis, full channel width.
                pl.BlockSpec((block_batch, C), lambda i: (i, 0)),
                # Weights / packed vectors: full blocks, resident across the grid.
                pl.BlockSpec((C, C), lambda i: (0, 0)),
                pl.BlockSpec((4, H, H), lambda i: (0, 0, 0)),
                pl.BlockSpec((H, 2 * H), lambda i: (0, 0)),
                pl.BlockSpec((5, C), lambda i: (0, 0)),
            ],
            out_specs=pl.BlockSpec((block_batch, C), lambda i: (i, 0)),
        ),
        compiler_params=pltpu.CompilerParams(
            # Batch axis is embarrassingly parallel (shards across v7x's 2 TCs
            # when the grid has >= 2 steps; grid of 1 on single-TC chips).
            dimension_semantics=("parallel",),
        ),
    )(x, w_t, hidden_w_t, head_w_t, vecs)


def init_params(key, channels):
    """Deterministic synthetic parameters matching the PyTorch module's shapes."""
    H = channels // 2
    keys = jax.random.split(key, 12)

    # Lin_bidirectional: orthogonal weight [C, C], zero bias [C]
    w_raw = jax.random.normal(keys[0], (channels, channels), jnp.float32)
    w_orth, _ = jnp.linalg.qr(w_raw)

    def lin_init(k):
        kw, kb = jax.random.split(k)
        bound = 1.0 / jnp.sqrt(H)
        w = jax.random.uniform(kw, (H, H), jnp.float32, -bound, bound)
        b = jax.random.uniform(kb, (H,), jnp.float32, -bound, bound)
        return w, b

    lina_w, lina_b = lin_init(keys[1])
    linb_w, linb_b = lin_init(keys[2])
    linc_w, linc_b = lin_init(keys[3])
    lind_w, lind_b = lin_init(keys[4])
    mults_w, mults_b = lin_init(keys[5])
    adds_w, adds_b = lin_init(keys[6])

    # PyTorch inits these to zero; use small deterministic values so the
    # y-branch of the coupling is exercised (semantics unchanged).
    m_scale = 0.1 * jax.random.normal(keys[7], (H,), jnp.float32)
    add_scale = 0.1 * jax.random.normal(keys[8], (H,), jnp.float32)

    return dict(
        w=w_orth, b=jnp.zeros((channels,), jnp.float32),
        lina_w=lina_w, lina_b=lina_b,
        linb_w=linb_w, linb_b=linb_b,
        linc_w=linc_w, linc_b=linc_b,
        lind_w=lind_w, lind_b=lind_b,
        mults_w=mults_w, mults_b=mults_b,
        adds_w=adds_w, adds_b=adds_b,
        m_scale=m_scale, add_scale=add_scale,
    )


def fc_block_reference(x, p):
    """Pure-JAX f32 reference of FC_block.forward for validation."""
    C = x.shape[1]
    H = C // 2
    relu = lambda t: jnp.maximum(t, 0.0)
    lin = lambda t, w, b: t @ w.T + b

    data = x @ p["w"].T + p["b"]
    xa, y = data[:, :H], data[:, H:]

    t = lin(relu(xa), p["lina_w"], p["lina_b"])
    t = lin(relu(t), p["linb_w"], p["linb_b"]) + xa
    prex = t
    t = lin(relu(t), p["linc_w"], p["linc_b"])
    t = lin(relu(t), p["lind_w"], p["lind_b"]) + prex
    t = relu(t)
    m = lin(t, p["mults_w"], p["mults_b"]) * p["m_scale"]
    a = lin(t, p["adds_w"], p["adds_b"]) * p["add_scale"]
    return jnp.concatenate([xa, y * jnp.exp(m) + a], axis=1)


if __name__ == "__main__":
    batch_size = 32
    channels = 32

    key = jax.random.PRNGKey(0)
    k_data, k_param = jax.random.split(key)

    # make_normal_batch: standard multivariate normal samples [batch, channels]
    x = jax.random.normal(k_data, (batch_size, channels), jnp.float32)
    params = init_params(k_param, channels)

    out = fc_block_forward(x, params)
    out = jax.block_until_ready(out)

    ref = fc_block_reference(x, params)
    assert out.shape == (batch_size, channels)
    # bf16 MXU operands (f32 accumulation) -> relaxed tolerance vs f32 reference.
    assert jnp.allclose(out, ref, atol=1e-1, rtol=5e-2), "mismatch vs reference"

    print("KERNEL_OK")
</pallas_src>

<mosaic_0001>
module attributes {stable_mosaic.version = 11 : i64} {
  func.func @fc_block_kernel(%arg0: i32, %arg1: memref<32x32xf32, #tpu.memory_space<vmem>>, %arg2: memref<32x32xbf16, #tpu.memory_space<vmem>>, %arg3: memref<4x16x16xbf16, #tpu.memory_space<vmem>>, %arg4: memref<16x32xbf16, #tpu.memory_space<vmem>>, %arg5: memref<5x32xf32, #tpu.memory_space<vmem>>, %arg6: memref<32x32xf32, #tpu.memory_space<vmem>>) attributes {dimension_semantics = [#tpu.dimension_semantics<parallel>], iteration_bounds = array<i64: 1>, scalar_prefetch = 0 : i64, scratch_operands = 0 : i64, tpu.core_type = #tpu.core_type<tc>, window_params = [{transform_indices = @transform_0, window_bounds = array<i64: 32, 32>}, {pipeline_mode = #tpu.pipeline_mode<synchronous>, transform_indices = @transform_1, window_bounds = array<i64: 32, 32>}, {pipeline_mode = #tpu.pipeline_mode<synchronous>, transform_indices = @transform_2, window_bounds = array<i64: 4, 16, 16>}, {pipeline_mode = #tpu.pipeline_mode<synchronous>, transform_indices = @transform_3, window_bounds = array<i64: 16, 32>}, {pipeline_mode = #tpu.pipeline_mode<synchronous>, transform_indices = @transform_4, window_bounds = array<i64: 5, 32>}, {transform_indices = @transform_5, window_bounds = array<i64: 32, 32>}]} {
    %c0 = arith.constant 0 : index
    %c0_0 = arith.constant 0 : index
    %0 = vector.load %arg1[%c0, %c0_0] : memref<32x32xf32, #tpu.memory_space<vmem>>, vector<32x32xf32>
    %c0_1 = arith.constant 0 : index
    %c0_2 = arith.constant 0 : index
    %1 = vector.load %arg5[%c0_1, %c0_2] : memref<5x32xf32, #tpu.memory_space<vmem>>, vector<5x32xf32>
    %2 = vector.extract_strided_slice %1 {offsets = [0, 0], sizes = [1, 32], strides = [1, 1]} : vector<5x32xf32> to vector<1x32xf32>
    %3 = vector.extract_strided_slice %1 {offsets = [1, 0], sizes = [1, 16], strides = [1, 1]} : vector<5x32xf32> to vector<1x16xf32>
    %4 = vector.extract_strided_slice %1 {offsets = [1, 16], sizes = [1, 16], strides = [1, 1]} : vector<5x32xf32> to vector<1x16xf32>
    %5 = vector.extract_strided_slice %1 {offsets = [2, 0], sizes = [1, 16], strides = [1, 1]} : vector<5x32xf32> to vector<1x16xf32>
    %6 = vector.extract_strided_slice %1 {offsets = [2, 16], sizes = [1, 16], strides = [1, 1]} : vector<5x32xf32> to vector<1x16xf32>
    %7 = vector.extract_strided_slice %1 {offsets = [3, 0], sizes = [1, 32], strides = [1, 1]} : vector<5x32xf32> to vector<1x32xf32>
    %8 = vector.extract_strided_slice %1 {offsets = [4, 0], sizes = [1, 32], strides = [1, 1]} : vector<5x32xf32> to vector<1x32xf32>
    %9 = arith.truncf %0 : vector<32x32xf32> to vector<32x32xbf16>
    %c0_3 = arith.constant 0 : index
    %c0_4 = arith.constant 0 : index
    %10 = vector.load %arg2[%c0_3, %c0_4] : memref<32x32xbf16, #tpu.memory_space<vmem>>, vector<32x32xbf16>
    %cst = arith.constant dense<0.000000e+00> : vector<32x32xf32>
    %11 = tpu.matmul %9, %10, %cst {dimension_numbers = #tpu.dot_dimension_numbers<[1], [0], [0], [1], [0, 0, 1, 1], [], []>} : vector<32x32xbf16>, vector<32x32xbf16>, vector<32x32xf32> -> vector<32x32xf32>
    %12 = vector.broadcast %2 : vector<1x32xf32> to vector<32x32xf32>
    %13 = arith.addf %11, %12 : vector<32x32xf32>
    %14 = vector.extract_strided_slice %13 {offsets = [0, 0], sizes = [32, 16], strides = [1, 1]} : vector<32x32xf32> to vector<32x16xf32>
    %15 = vector.extract_strided_slice %13 {offsets = [0, 16], sizes = [32, 16], strides = [1, 1]} : vector<32x32xf32> to vector<32x16xf32>
    %cst_5 = arith.constant 0.000000e+00 : f32
    %16 = vector.broadcast %cst_5 : f32 to vector<32x16xf32>
    %17 = arith.maximumf %14, %16 : vector<32x16xf32>
    %18 = arith.truncf %17 : vector<32x16xf32> to vector<32x16xbf16>
    %c0_6 = arith.constant 0 : index
    %c0_7 = arith.constant 0 : index
    %c0_8 = arith.constant 0 : index
    %19 = vector.load %arg3[%c0_6, %c0_7, %c0_8] : memref<4x16x16xbf16, #tpu.memory_space<vmem>>, vector<1x16x16xbf16>
    %20 = vector.shape_cast %19 : vector<1x16x16xbf16> to vector<16x16xbf16>
    %cst_9 = arith.constant dense<0.000000e+00> : vector<32x16xf32>
    %21 = tpu.matmul %18, %20, %cst_9 {dimension_numbers = #tpu.dot_dimension_numbers<[1], [0], [0], [1], [0, 0, 1, 1], [], []>} : vector<32x16xbf16>, vector<16x16xbf16>, vector<32x16xf32> -> vector<32x16xf32>
    %22 = vector.broadcast %3 : vector<1x16xf32> to vector<32x16xf32>
    %23 = arith.addf %21, %22 : vector<32x16xf32>
    %cst_10 = arith.constant 0.000000e+00 : f32
    %24 = vector.broadcast %cst_10 : f32 to vector<32x16xf32>
    %25 = arith.maximumf %23, %24 : vector<32x16xf32>
    %26 = arith.truncf %25 : vector<32x16xf32> to vector<32x16xbf16>
    %c1 = arith.constant 1 : index
    %c0_11 = arith.constant 0 : index
    %c0_12 = arith.constant 0 : index
    %27 = vector.load %arg3[%c1, %c0_11, %c0_12] : memref<4x16x16xbf16, #tpu.memory_space<vmem>>, vector<1x16x16xbf16>
    %28 = vector.shape_cast %27 : vector<1x16x16xbf16> to vector<16x16xbf16>
    %cst_13 = arith.constant dense<0.000000e+00> : vector<32x16xf32>
    %29 = tpu.matmul %26, %28, %cst_13 {dimension_numbers = #tpu.dot_dimension_numbers<[1], [0], [0], [1], [0, 0, 1, 1], [], []>} : vector<32x16xbf16>, vector<16x16xbf16>, vector<32x16xf32> -> vector<32x16xf32>
    %30 = vector.broadcast %4 : vector<1x16xf32> to vector<32x16xf32>
    %31 = arith.addf %29, %30 : vector<32x16xf32>
    %32 = arith.addf %31, %14 : vector<32x16xf32>
    %cst_14 = arith.constant 0.000000e+00 : f32
    %33 = vector.broadcast %cst_14 : f32 to vector<32x16xf32>
    %34 = arith.maximumf %32, %33 : vector<32x16xf32>
    %35 = arith.truncf %34 : vector<32x16xf32> to vector<32x16xbf16>
    %c2 = arith.constant 2 : index
    %c0_15 = arith.constant 0 : index
    %c0_16 = arith.constant 0 : index
    %36 = vector.load %arg3[%c2, %c0_15, %c0_16] : memref<4x16x16xbf16, #tpu.memory_space<vmem>>, vector<1x16x16xbf16>
    %37 = vector.shape_cast %36 : vector<1x16x16xbf16> to vector<16x16xbf16>
    %cst_17 = arith.constant dense<0.000000e+00> : vector<32x16xf32>
    %38 = tpu.matmul %35, %37, %cst_17 {dimension_numbers = #tpu.dot_dimension_numbers<[1], [0], [0], [1], [0, 0, 1, 1], [], []>} : vector<32x16xbf16>, vector<16x16xbf16>, vector<32x16xf32> -> vector<32x16xf32>
    %39 = vector.broadcast %5 : vector<1x16xf32> to vector<32x16xf32>
    %40 = arith.addf %38, %39 : vector<32x16xf32>
    %cst_18 = arith.constant 0.000000e+00 : f32
    %41 = vector.broadcast %cst_18 : f32 to vector<32x16xf32>
    %42 = arith.maximumf %40, %41 : vector<32x16xf32>
    %43 = arith.truncf %42 : vector<32x16xf32> to vector<32x16xbf16>
    %c3 = arith.constant 3 : index
    %c0_19 = arith.constant 0 : index
    %c0_20 = arith.constant 0 : index
    %44 = vector.load %arg3[%c3, %c0_19, %c0_20] : memref<4x16x16xbf16, #tpu.memory_space<vmem>>, vector<1x16x16xbf16>
    %45 = vector.shape_cast %44 : vector<1x16x16xbf16> to vector<16x16xbf16>
    %cst_21 = arith.constant dense<0.000000e+00> : vector<32x16xf32>
    %46 = tpu.matmul %43, %45, %cst_21 {dimension_numbers = #tpu.dot_dimension_numbers<[1], [0], [0], [1], [0, 0, 1, 1], [], []>} : vector<32x16xbf16>, vector<16x16xbf16>, vector<32x16xf32> -> vector<32x16xf32>
    %47 = vector.broadcast %6 : vector<1x16xf32> to vector<32x16xf32>
    %48 = arith.addf %46, %47 : vector<32x16xf32>
    %49 = arith.addf %48, %32 : vector<32x16xf32>
    %cst_22 = arith.constant 0.000000e+00 : f32
    %50 = vector.broadcast %cst_22 : f32 to vector<32x16xf32>
    %51 = arith.maximumf %49, %50 : vector<32x16xf32>
    %52 = arith.truncf %51 : vector<32x16xf32> to vector<32x16xbf16>
    %c0_23 = arith.constant 0 : index
    %c0_24 = arith.constant 0 : index
    %53 = vector.load %arg4[%c0_23, %c0_24] : memref<16x32xbf16, #tpu.memory_space<vmem>>, vector<16x32xbf16>
    %cst_25 = arith.constant dense<0.000000e+00> : vector<32x32xf32>
    %54 = tpu.matmul %52, %53, %cst_25 {dimension_numbers = #tpu.dot_dimension_numbers<[1], [0], [0], [1], [0, 0, 1, 1], [], []>} : vector<32x16xbf16>, vector<16x32xbf16>, vector<32x32xf32> -> vector<32x32xf32>
    %55 = vector.broadcast %7 : vector<1x32xf32> to vector<32x32xf32>
    %56 = arith.addf %54, %55 : vector<32x32xf32>
    %57 = vector.broadcast %8 : vector<1x32xf32> to vector<32x32xf32>
    %58 = arith.mulf %56, %57 : vector<32x32xf32>
    %59 = vector.extract_strided_slice %58 {offsets = [0, 0], sizes = [32, 16], strides = [1, 1]} : vector<32x32xf32> to vector<32x16xf32>
    %60 = vector.extract_strided_slice %58 {offsets = [0, 16], sizes = [32, 16], strides = [1, 1]} : vector<32x32xf32> to vector<32x16xf32>
    %c0_26 = arith.constant 0 : index
    %c0_27 = arith.constant 0 : index
    %61 = vector.load %arg6[%c0_26, %c0_27] : memref<32x32xf32, #tpu.memory_space<vmem>>, vector<32x16xf32>
    tpu.vector_store %arg6[%c0_26, %c0_27], %14 {strides = array<i32>} : memref<32x32xf32, #tpu.memory_space<vmem>>, vector<32x16xf32>,
    %62 = math.exp %59 : vector<32x16xf32>
    %63 = arith.mulf %15, %62 : vector<32x16xf32>
    %64 = arith.addf %63, %60 : vector<32x16xf32>
    %c0_28 = arith.constant 0 : index
    %c16 = arith.constant 16 : index
    %65 = vector.load %arg6[%c0_28, %c16] : memref<32x32xf32, #tpu.memory_space<vmem>>, vector<32x16xf32>
    tpu.vector_store %arg6[%c0_28, %c16], %64 {strides = array<i32>} : memref<32x32xf32, #tpu.memory_space<vmem>>, vector<32x16xf32>,
    return
  }
  func.func @transform_0(%arg0: i32) -> (i32, i32) {
    %c0_i32 = arith.constant 0 : i32
    %c0_i32_0 = arith.constant 0 : i32
    return %arg0, %c0_i32 : i32, i32
  }
  func.func @transform_1(%arg0: i32) -> (i32, i32) {
    %c0_i32 = arith.constant 0 : i32
    %c0_i32_0 = arith.constant 0 : i32
    %c0_i32_1 = arith.constant 0 : i32
    return %c0_i32, %c0_i32_0 : i32, i32
  }
  func.func @transform_2(%arg0: i32) -> (i32, i32, i32) {
    %c0_i32 = arith.constant 0 : i32
    %c0_i32_0 = arith.constant 0 : i32
    %c0_i32_1 = arith.constant 0 : i32
    %c0_i32_2 = arith.constant 0 : i32
    return %c0_i32, %c0_i32_0, %c0_i32_1 : i32, i32, i32
  }
  func.func @transform_3(%arg0: i32) -> (i32, i32) {
    %c0_i32 = arith.constant 0 : i32
    %c0_i32_0 = arith.constant 0 : i32
    %c0_i32_1 = arith.constant 0 : i32
    return %c0_i32, %c0_i32_0 : i32, i32
  }
  func.func @transform_4(%arg0: i32) -> (i32, i32) {
    %c0_i32 = arith.constant 0 : i32
    %c0_i32_0 = arith.constant 0 : i32
    %c0_i32_1 = arith.constant 0 : i32
    return %c0_i32, %c0_i32_0 : i32, i32
  }
  func.func @transform_5(%arg0: i32) -> (i32, i32) {
    %c0_i32 = arith.constant 0 : i32
    %c0_i32_0 = arith.constant 0 : i32
    return %arg0, %c0_i32 : i32, i32
  }
}

</mosaic_0001>

<llo_original>
// kernel: tpu_custom_call.1
$region0: #{tpu_custom_call.1}
  #allocation0 [shape = 'u32[]', space=smem, size = 0x4, offset = 0x4, fixed_abs, tag = 'smem constant byte address 0x4 - core index']
  #allocation1 [shape = 'u32[72,128]{1,0:T(1,128)}', space=vmem, size = 0x9000, scoped, tag = 'internal scratch']
  %s0 = inlined_call_operand.hbm [shape: f32[32,32], index: 0, kind: input, shape index: {}]
  %s1 = inlined_call_operand.hbm [shape: bf16[32,32], index: 1, kind: input, shape index: {}]
  %s2 = inlined_call_operand.hbm [shape: bf16[4,16,16], index: 2, kind: input, shape index: {}]
  %s3 = inlined_call_operand.hbm [shape: bf16[16,32], index: 3, kind: input, shape index: {}]
  %s4 = inlined_call_operand.hbm [shape: f32[5,32], index: 4, kind: input, shape index: {}]
  %s5 = inlined_call_operand.hbm [shape: f32[32,32], index: 5, kind: output, shape index: {}]
  %s6 = sld [smem:[#allocation0]]
  $region50: #{tpu_custom_call.1} parent=0
    _
  %s8 = ssub.s32 1, %s6
  %s9 = scalar_select 0, %s8, %s6
  $region1: #{tpu_custom_call.1} parent=0
    #allocation2 [shape = 'u8[16384]{0}', space=vmem, size = 0x4000, scoped, tag = 'input window, operand 0, single buffered']
    #allocation3 [shape = 's32[1]{0}', space=sflag, size = 0x4, scoped, tag = 'scoped memory for tpu_custom_call.1']
    #allocation4 [shape = 's32[1]{0}', space=sflag, size = 0x4, scoped, tag = 'scoped memory for tpu_custom_call.1']
    #allocation5 [shape = 'u8[8192]{0}', space=vmem, size = 0x2000, scoped, tag = 'input window, operand 1, single buffered']
    #allocation6 [shape = 's32[1]{0}', space=sflag, size = 0x4, scoped, tag = 'scoped memory for tpu_custom_call.1']
    #allocation7 [shape = 'u8[16384]{0}', space=vmem, size = 0x4000, scoped, tag = 'input window, operand 2, single buffered']
    #allocation8 [shape = 'u8[4096]{0}', space=vmem, size = 0x1000, scoped, tag = 'input window, operand 3, single buffered']
    #allocation9 [shape = 's32[1]{0}', space=sflag, size = 0x4, scoped, tag = 'scoped memory for tpu_custom_call.1']
    #allocation10 [shape = 'u8[4096]{0}', space=vmem, size = 0x1000, scoped, tag = 'input window, operand 4, single buffered']
    #allocation11 [shape = 'u8[16384]{0}', space=vmem, size = 0x4000, scoped, tag = 'output window, operand 0, single buffered']
    %10 = vsyncpa [#allocation3], 0
    %11 = vsyncpa [#allocation6], 0
    %12 = vsyncpa [#allocation9], 0
    %13 = vsyncpa [#allocation4], 0
    // Predicated region
    $region2: #{tpu_custom_call.1} parent=1 // pred_check
      _
    $region3: #{tpu_custom_call.1} parent=1 // pred_check_branch
      %15 = sbr.rel (0) target = $region5
    $region4: #{tpu_custom_call.1} parent=1 // pred_region
      %17 = vsyncadd [#allocation3], 0
      %s18 = sshll.u32 %s0, 4
      %s19 = int_to_ptr.hbm [resolvable:$true] %s18
      %s20 = sshll.u32 [#allocation2], 4
      %s21 = int_to_ptr.vmem [resolvable:$true] %s20
      %26 = dma.hbm_to_vmem [thread:$0]  %s19, 512, %s21, [#allocation3], 128, 128, 8
    $region5: #{tpu_custom_call.1} parent=1 // pred_fallthru
      _
    // Predicated region
    $region6: #{tpu_custom_call.1} parent=1 // pred_check
      _
    $region7: #{tpu_custom_call.1} parent=1 // pred_check_branch
      %28 = sbr.rel (0) target = $region9
    $region8: #{tpu_custom_call.1} parent=1 // pred_region
      %30 = vsyncadd [#allocation6], 0
      %s31 = sshll.u32 %s1, 4
      %s32 = int_to_ptr.hbm [resolvable:$true] %s31
      %s33 = sshll.u32 [#allocation5], 4
      %s34 = int_to_ptr.vmem [resolvable:$true] %s33
      %39 = dma.hbm_to_vmem [thread:$0]  %s32, 256, %s34, [#allocation6], 64, 64, 4
    $region9: #{tpu_custom_call.1} parent=1 // pred_fallthru
      _
    // Predicated region
    $region10: #{tpu_custom_call.1} parent=1 // pred_check
      _
    $region11: #{tpu_custom_call.1} parent=1 // pred_check_branch
      %41 = sbr.rel (0) target = $region13
    $region12: #{tpu_custom_call.1} parent=1 // pred_region
      %43 = vsyncadd [#allocation6], 0
      %s44 = sshll.u32 %s2, 4
      %s45 = int_to_ptr.hbm [resolvable:$true] %s44
      %s46 = sshll.u32 [#allocation7], 4
      %s47 = int_to_ptr.vmem [resolvable:$true] %s46
      %52 = dma.hbm_to_vmem [thread:$0]  %s45, 512, %s47, [#allocation6], 64, 64, 4
    $region13: #{tpu_custom_call.1} parent=1 // pred_fallthru
      _
    // Predicated region
    $region14: #{tpu_custom_call.1} parent=1 // pred_check
      _
    $region15: #{tpu_custom_call.1} parent=1 // pred_check_branch
      %54 = sbr.rel (0) target = $region17
    $region16: #{tpu_custom_call.1} parent=1 // pred_region
      %56 = vsyncadd [#allocation9], 0
      %s57 = sshll.u32 %s3, 4
      %s58 = int_to_ptr.hbm [resolvable:$true] %s57
      %s59 = sshll.u32 [#allocation8], 4
      %s60 = int_to_ptr.vmem [resolvable:$true] %s59
      %65 = dma.hbm_to_vmem [thread:$0]  %s58, 128, %s60, [#allocation9], 64, 64, 4
    $region17: #{tpu_custom_call.1} parent=1 // pred_fallthru
      _
    // Predicated region
    $region18: #{tpu_custom_call.1} parent=1 // pred_check
      _
    $region19: #{tpu_custom_call.1} parent=1 // pred_check_branch
      %67 = sbr.rel (0) target = $region21
    $region20: #{tpu_custom_call.1} parent=1 // pred_region
      %69 = vsyncadd [#allocation9], 0
      %s71 = sshll.u32 %s4, 4
      %s72 = int_to_ptr.hbm [resolvable:$true] %s71
      %s73 = sshll.u32 [#allocation10], 4
      %s74 = int_to_ptr.vmem [resolvable:$true] %s73
      %76 = dma.hbm_to_vmem [thread:$0]  %s72, 128, %s74, [#allocation9]
    $region21: #{tpu_custom_call.1} parent=1 // pred_fallthru
      _
    // Predicated region
    $region22: #{tpu_custom_call.1} parent=1 // pred_check
      _
    $region23: #{tpu_custom_call.1} parent=1 // pred_check_branch
      %78 = sbr.rel (0) target = $region25
    $region24: #{tpu_custom_call.1} parent=1 // pred_region
      %80 = dma.done [#allocation3], 512
    $region25: #{tpu_custom_call.1} parent=1 // pred_fallthru
      _
    // Predicated region
    $region26: #{tpu_custom_call.1} parent=1 // pred_check
      _
    $region27: #{tpu_custom_call.1} parent=1 // pred_check_branch
      %82 = sbr.rel (0) target = $region29
    $region28: #{tpu_custom_call.1} parent=1 // pred_region
      %84 = dma.done [#allocation6], 256
    $region29: #{tpu_custom_call.1} parent=1 // pred_fallthru
      _
    // Predicated region
    $region30: #{tpu_custom_call.1} parent=1 // pred_check
      _
    $region31: #{tpu_custom_call.1} parent=1 // pred_check_branch
      %86 = sbr.rel (0) target = $region33
    $region32: #{tpu_custom_call.1} parent=1 // pred_region
      %88 = dma.done [#allocation6], 512
    $region33: #{tpu_custom_call.1} parent=1 // pred_fallthru
      _
    // Predicated region
    $region34: #{tpu_custom_call.1} parent=1 // pred_check
      _
    $region35: #{tpu_custom_call.1} parent=1 // pred_check_branch
      %90 = sbr.rel (0) target = $region37
    $region36: #{tpu_custom_call.1} parent=1 // pred_region
      %92 = dma.done [#allocation9], 128
    $region37: #{tpu_custom_call.1} parent=1 // pred_fallthru
      _
    // Predicated region
    $region38: #{tpu_custom_call.1} parent=1 // pred_check
      _
    $region39: #{tpu_custom_call.1} parent=1 // pred_check_branch
      %94 = sbr.rel (0) target = $region41
    $region40: #{tpu_custom_call.1} parent=1 // pred_region
      %96 = dma.done [#allocation9], 128
    $region41: #{tpu_custom_call.1} parent=1 // pred_fallthru
      _
    %v98 = vld [vmem:[#allocation2] sm:$0xff]
    %v99 = vld [vmem:[#allocation2 + $0x8] sm:$0xff]
    %v100 = vld [vmem:[#allocation2 + $0x10] sm:$0xff]
    %v101 = vld [vmem:[#allocation2 + $0x18] sm:$0xff]
    %v102 = vld [vmem:[#allocation10] sm:$0x1f]
    %v103 = vpack.c.bf16 %v99, %v98
    %v104 = vpack.c.bf16 %v101, %v100
    %v105 = vld [vmem:[#allocation5] sm:$0xf]
    %v106 = vld [vmem:[#allocation5 + $0x4] sm:$0xf]
    %v107 = vld [vmem:[#allocation5 + $0x8] sm:$0xf]
    %v108 = vld [vmem:[#allocation5 + $0xc] sm:$0xf]
    %v109 = vperm.slane %v102, 0
    %v114 = vunpack.c.l.b16 %v105
    %v115 = vunpack.c.l.b16 %v106
    %v116 = vunpack.c.l.b16 %v107
    %v117 = vunpack.c.l.b16 %v108
    %v118 = vpack.c.b16 %v115, %v114
    %v119 = vpack.c.b16 %v117, %v116
    %vm122 = vcmask 261120
    %v124 = vsel %vm122, %v103, 0
    %v127 = vsel %vm122, %v104, 0
    %129 = vmatpush.bf16.msra.mxu0 0
    %130 = vmatpush.bf16.msra.mxu0 0
    %131 = vmatpush.bf16.msra.mxu0 0
    %132 = vmatpush.bf16.msra.mxu0 0
    %133 = vmatpush.bf16.msra.mxu0 0
    %134 = vmatpush.bf16.msra.mxu0 0
    %135 = vmatpush.bf16.msra.mxu0 %v119
    %136 = vmatpush.bf16.msra.mxu0 %v118
    %137 = vmatmul.bf16.gmra.mxu0 %v124
    %v138 = vpop.f32.mrf.mxu0
    %v139 = vadd.f32 %v109, %v138
    %v140 = vpop.f32.mrf.mxu0
    %v141 = vadd.f32 %v109, %v140
    %142 = vmatmul.bf16.gmra.mxu0 %v127
    %v143 = vpop.f32.mrf.mxu0
    %v144 = vadd.f32 %v109, %v143
    %v145 = vpop.f32.mrf.mxu0
    %v146 = vadd.f32 %v109, %v145
    %147 = vdwg.mxu0
    %v148 = vmax.f32 %v139, 0.0
    %v149 = vmax.f32 %v141, 0.0
    %v150 = vmax.f32 %v144, 0.0
    %v151 = vmax.f32 %v146, 0.0
    %v152 = vpack.c.bf16 %v149, %v148
    %v153 = vpack.c.bf16 %v151, %v150
    %v154 = vld [vmem:[#allocation7] sm:$0xf]
    %v155 = vld [vmem:[#allocation7 + $0x4] sm:$0xf]
    %v156 = vperm.slane %v102, 1
    %v159 = vunpack.c.l.b16 %v154
    %v160 = vunpack.c.l.b16 %v155
    %v161 = vpack.c.b16 %v160, %v159
    %vm163 = vcmask 130048
    %v165 = vsel %vm163, %v152, 0
    %v168 = vsel %vm163, %v153, 0
    %170 = vmatpush.bf16.msra.mxu0 0
    %171 = vmatpush.bf16.msra.mxu0 0
    %172 = vmatpush.bf16.msra.mxu0 0
    %173 = vmatpush.bf16.msra.mxu0 0
    %174 = vmatpush.bf16.msra.mxu0 0
    %175 = vmatpush.bf16.msra.mxu0 0
    %176 = vmatpush.bf16.msra.mxu0 0
    %177 = vmatpush.bf16.msra.mxu0 %v161
    %178 = vmatmul.bf16.gmra.mxu0 %v165
    %v179 = vpop.f32.mrf.mxu0
    %v180 = vadd.f32 %v156, %v179
    %v181 = vpop.f32.mrf.mxu0
    %v182 = vadd.f32 %v156, %v181
    %183 = vmatmul.bf16.gmra.mxu0 %v168
    %v184 = vpop.f32.mrf.mxu0
    %v185 = vadd.f32 %v156, %v184
    %v186 = vpop.f32.mrf.mxu0
    %v187 = vadd.f32 %v156, %v186
    %188 = vdwg.mxu0
    %v189 = vmax.f32 %v180, 0.0
    %v190 = vmax.f32 %v182, 0.0
    %v191 = vmax.f32 %v185, 0.0
    %v192 = vmax.f32 %v187, 0.0
    %v193 = vpack.c.bf16 %v190, %v189
    %v194 = vpack.c.bf16 %v192, %v191
    %s195 = scalar_lea.vmem [#allocation7], 8
    %v196 = vld [vmem:[%s195] sm:$0xf]
    %v197 = vld [vmem:[%s195 + $0x4] sm:$0xf]
    %v200 = vunpack.c.l.b16 %v196
    %v201 = vunpack.c.l.b16 %v197
    %v202 = vpack.c.b16 %v201, %v200
    %205 = vrot.lane.b32.xlu0 %v156, 112
    %v206 = vpop.permute.xlu0 %205
    %v209 = vsel %vm163, %v193, 0
    %v212 = vsel %vm163, %v194, 0
    %214 = vmatpush.bf16.msra.mxu0 0
    %215 = vmatpush.bf16.msra.mxu0 0
    %216 = vmatpush.bf16.msra.mxu0 0
    %217 = vmatpush.bf16.msra.mxu0 0
    %218 = vmatpush.bf16.msra.mxu0 0
    %219 = vmatpush.bf16.msra.mxu0 0
    %220 = vmatpush.bf16.msra.mxu0 0
    %221 = vmatpush.bf16.msra.mxu0 %v202
    %222 = vmatmul.bf16.gmra.mxu0 %v209
    %v223 = vpop.f32.mrf.mxu0
    %v224 = vadd.f32 %v206, %v223
    %v225 = vpop.f32.mrf.mxu0
    %v226 = vadd.f32 %v206, %v225
    %227 = vmatmul.bf16.gmra.mxu0 %v212
    %v228 = vpop.f32.mrf.mxu0
    %v229 = vadd.f32 %v206, %v228
    %v230 = vpop.f32.mrf.mxu0
    %v231 = vadd.f32 %v206, %v230
    %232 = vdwg.mxu0
    %v233 = vadd.f32 %v224, %v139
    %v234 = vadd.f32 %v226, %v141
    %v235 = vadd.f32 %v229, %v144
    %v236 = vadd.f32 %v231, %v146
    %v237 = vmax.f32 %v233, 0.0
    %v238 = vmax.f32 %v234, 0.0
    %v239 = vmax.f32 %v235, 0.0
    %v240 = vmax.f32 %v236, 0.0
    %v241 = vpack.c.bf16 %v238, %v237
    %v242 = vpack.c.bf16 %v240, %v239
    %s243 = scalar_lea.vmem [#allocation7], 16
    %v244 = vld [vmem:[%s243] sm:$0xf]
    %v245 = vld [vmem:[%s243 + $0x4] sm:$0xf]
    %v246 = vperm.slane %v102, 2
    %v249 = vunpack.c.l.b16 %v244
    %v250 = vunpack.c.l.b16 %v245
    %v251 = vpack.c.b16 %v250, %v249
    %v254 = vsel %vm163, %v241, 0
    %v257 = vsel %vm163, %v242, 0
    %259 = vmatpush.bf16.msra.mxu0 0
    %260 = vmatpush.bf16.msra.mxu0 0
    %261 = vmatpush.bf16.msra.mxu0 0
    %262 = vmatpush.bf16.msra.mxu0 0
    %263 = vmatpush.bf16.msra.mxu0 0
    %264 = vmatpush.bf16.msra.mxu0 0
    %265 = vmatpush.bf16.msra.mxu0 0
    %266 = vmatpush.bf16.msra.mxu0 %v251
    %267 = vmatmul.bf16.gmra.mxu0 %v254
    %v268 = vpop.f32.mrf.mxu0
    %v269 = vadd.f32 %v246, %v268
    %v270 = vpop.f32.mrf.mxu0
    %v271 = vadd.f32 %v246, %v270
    %272 = vmatmul.bf16.gmra.mxu0 %v257
    %v273 = vpop.f32.mrf.mxu0
    %v274 = vadd.f32 %v246, %v273
    %v275 = vpop.f32.mrf.mxu0
    %v276 = vadd.f32 %v246, %v275
    %277 = vdwg.mxu0
    %v278 = vmax.f32 %v269, 0.0
    %v279 = vmax.f32 %v271, 0.0
    %v280 = vmax.f32 %v274, 0.0
    %v281 = vmax.f32 %v276, 0.0
    %v282 = vpack.c.bf16 %v279, %v278
    %v283 = vpack.c.bf16 %v281, %v280
    %s284 = scalar_lea.vmem [#allocation7], 24
    %v285 = vld [vmem:[%s284] sm:$0xf]
    %v286 = vld [vmem:[%s284 + $0x4] sm:$0xf]
    %v289 = vunpack.c.l.b16 %v285
    %v290 = vunpack.c.l.b16 %v286
    %v291 = vpack.c.b16 %v290, %v289
    %294 = vrot.lane.b32.xlu0 %v246, 112
    %v295 = vpop.permute.xlu0 %294
    %v298 = vsel %vm163, %v282, 0
    %v301 = vsel %vm163, %v283, 0
    %303 = vmatpush.bf16.msra.mxu0 0
    %304 = vmatpush.bf16.msra.mxu0 0
    %305 = vmatpush.bf16.msra.mxu0 0
    %306 = vmatpush.bf16.msra.mxu0 0
    %307 = vmatpush.bf16.msra.mxu0 0
    %308 = vmatpush.bf16.msra.mxu0 0
    %309 = vmatpush.bf16.msra.mxu0 0
    %310 = vmatpush.bf16.msra.mxu0 %v291
    %311 = vmatmul.bf16.gmra.mxu0 %v298
    %v312 = vpop.f32.mrf.mxu0
    %v313 = vadd.f32 %v295, %v312
    %v314 = vpop.f32.mrf.mxu0
    %v315 = vadd.f32 %v295, %v314
    %316 = vmatmul.bf16.gmra.mxu0 %v301
    %v317 = vpop.f32.mrf.mxu0
    %v318 = vadd.f32 %v295, %v317
    %v319 = vpop.f32.mrf.mxu0
    %v320 = vadd.f32 %v295, %v319
    %321 = vdwg.mxu0
    %v322 = vadd.f32 %v313, %v233
    %v323 = vadd.f32 %v315, %v234
    %v324 = vadd.f32 %v318, %v235
    %v325 = vadd.f32 %v320, %v236
    %v326 = vmax.f32 %v322, 0.0
    %v327 = vmax.f32 %v323, 0.0
    %v328 = vmax.f32 %v324, 0.0
    %v329 = vmax.f32 %v325, 0.0
    %v330 = vpack.c.bf16 %v327, %v326
    %v331 = vpack.c.bf16 %v329, %v328
    %v332 = vld [vmem:[#allocation8] sm:$0xf]
    %v333 = vld [vmem:[#allocation8 + $0x4] sm:$0xf]
    %v334 = vperm.slane %v102, 3
    %v337 = vunpack.c.l.b16 %v332
    %v338 = vunpack.c.l.b16 %v333
    %v339 = vpack.c.b16 %v338, %v337
    %v342 = vsel %vm163, %v330, 0
    %v345 = vsel %vm163, %v331, 0
    %347 = vmatpush.bf16.msra.mxu0 0
    %348 = vmatpush.bf16.msra.mxu0 0
    %349 = vmatpush.bf16.msra.mxu0 0
    %350 = vmatpush.bf16.msra.mxu0 0
    %351 = vmatpush.bf16.msra.mxu0 0
    %352 = vmatpush.bf16.msra.mxu0 0
    %353 = vmatpush.bf16.msra.mxu0 0
    %354 = vmatpush.bf16.msra.mxu0 %v339
    %355 = vmatmul.bf16.gmra.mxu0 %v342
    %v356 = vpop.f32.mrf.mxu0
    %v357 = vadd.f32 %v334, %v356
    %v358 = vpop.f32.mrf.mxu0
    %v359 = vadd.f32 %v334, %v358
    %360 = vmatmul.bf16.gmra.mxu0 %v345
    %v361 = vpop.f32.mrf.mxu0
    %v362 = vadd.f32 %v334, %v361
    %v363 = vpop.f32.mrf.mxu0
    %v364 = vadd.f32 %v334, %v363
    %365 = vdwg.mxu0
    %v366 = vperm.slane %v102, 4
    %v367 = vmul.f32 %v357, %v366
    %v368 = vmul.f32 %v359, %v366
    %v369 = vmul.f32 %v362, %v366
    %v370 = vmul.f32 %v364, %v366
    %371 = vst.msk [vmem:[#allocation11] sm:$0xff] %vm163, %v139
    %372 = vst.msk [vmem:[#allocation11 + $0x8] sm:$0xff] %vm163, %v141
    %373 = vst.msk [vmem:[#allocation11 + $0x10] sm:$0xff] %vm163, %v144
    %374 = vst.msk [vmem:[#allocation11 + $0x18] sm:$0xff] %vm163, %v146
    %v375 = vmul.f32 %v367, 1.442695
    %v376 = vpow.pop %v375
    %v377 = vmul.f32 %v368, 1.442695
    %v378 = vpow.pop %v377
    %v379 = vmul.f32 %v369, 1.442695
    %v380 = vpow.pop %v379
    %v381 = vmul.f32 %v370, 1.442695
    %v382 = vpow.pop %v381
    %387 = vrot.lane.b32.xlu0 %v376, 16
    %v388 = vpop.permute.xlu0 %387
    %389 = vrot.lane.b32.xlu0 %v378, 16
    %v390 = vpop.permute.xlu0 %389
    %391 = vrot.lane.b32.xlu0 %v380, 16
    %v392 = vpop.permute.xlu0 %391
    %393 = vrot.lane.b32.xlu0 %v382, 16
    %v394 = vpop.permute.xlu0 %393
    %v399 = vmul.f32 %v139, %v388
    %v400 = vmul.f32 %v141, %v390
    %v401 = vmul.f32 %v144, %v392
    %v402 = vmul.f32 %v146, %v394
    %v403 = vadd.f32 %v399, %v367
    %v404 = vadd.f32 %v400, %v368
    %v405 = vadd.f32 %v401, %v369
    %v406 = vadd.f32 %v402, %v370
    %vm407 = vcmask 261248
    %408 = vst.msk [vmem:[#allocation11] sm:$0xff] %vm407, %v403
    %409 = vst.msk [vmem:[#allocation11 + $0x8] sm:$0xff] %vm407, %v404
    %410 = vst.msk [vmem:[#allocation11 + $0x10] sm:$0xff] %vm407, %v405
    %411 = vst.msk [vmem:[#allocation11 + $0x18] sm:$0xff] %vm407, %v406
    // Predicated region
    $region42: #{tpu_custom_call.1} parent=1 // pred_check
      _
    $region43: #{tpu_custom_call.1} parent=1 // pred_check_branch
      %413 = sbr.rel (0) target = $region45
    $region44: #{tpu_custom_call.1} parent=1 // pred_region
      %415 = vsyncadd [#allocation4], 0
      %s416 = sshll.u32 [#allocation11], 4
      %s417 = int_to_ptr.vmem [resolvable:$true] %s416
      %s418 = sshll.u32 %s5, 4
      %s419 = int_to_ptr.hbm [resolvable:$true] %s418
      %424 = dma.vmem_to_hbm [thread:$0]  %s417, 512, %s419, [#allocation4], 128, 128, 8
    $region45: #{tpu_custom_call.1} parent=1 // pred_fallthru
      _
    // Predicated region
    $region46: #{tpu_custom_call.1} parent=1 // pred_check
      _
    $region47: #{tpu_custom_call.1} parent=1 // pred_check_branch
      %426 = sbr.rel (0) target = $region49
    $region48: #{tpu_custom_call.1} parent=1 // pred_region
      %428 = dma.done [#allocation4], 512
    $region49: #{tpu_custom_call.1} parent=1 // pred_fallthru
      _
    %429 = vsyncpa [#allocation3], 1
    %430 = vsyncpa [#allocation6], 1
    %431 = vsyncpa [#allocation9], 1
    %432 = vsyncpa [#allocation4], 1

</llo_original>
